<compile_context>
chip_gen: v6e
topology: v6e:2x2x1
jax: 0.10.0
libtpu: 0.0.40
codegen_flags: <defaults>
</compile_context>

<pallas_src>
import functools

import jax
import jax.numpy as jnp
from jax.experimental import pallas as pl
from jax.experimental.pallas import tpu as pltpu

# Raw (PyTorch) geometry and 128-aligned padded geometry.
IN_RAW, H_RAW, OUT_RAW = 28 * 28, 200, 10        # 784, 200, 10
IN_PAD, H_PAD, OUT_PAD = 896, 256, 128           # zero-padded, lane/MXU aligned


def mlp_kernel(x_ref, w1_ref, b1_ref, w2_ref, b2_ref, w3_ref, b3_ref, o_ref):
    # x: (TILE_B, IN_PAD) bf16; weights pre-transposed (in, out) bf16; biases (1, out) f32.
    x = x_ref[...]
    h1 = jnp.dot(x, w1_ref[...], preferred_element_type=jnp.float32) + b1_ref[...]
    h1 = jnp.maximum(h1, 0.0).astype(jnp.bfloat16)        # ReLU in f32, back to bf16 for MXU
    h2 = jnp.dot(h1, w2_ref[...], preferred_element_type=jnp.float32) + b2_ref[...]
    h2 = jnp.maximum(h2, 0.0).astype(jnp.bfloat16)        # ReLU
    out = jnp.dot(h2, w3_ref[...], preferred_element_type=jnp.float32) + b3_ref[...]
    o_ref[...] = out.astype(o_ref.dtype)                  # lane-dense (TILE_B, 128) store


def _pad2d(a, rows, cols):
    return jnp.pad(a, ((0, rows - a.shape[0]), (0, cols - a.shape[1])))


def _round_up(x, m):
    return (x + m - 1) // m * m


def prepare_params(params):
    """One-time glue (do NOT call per forward): transpose PyTorch (out,in) weights to (in,out),
    zero-pad to 128-aligned dims, cast weights to bf16, biases to (1, out) f32.
    Zero padding keeps the valid output columns identical."""
    return {
        "w1": _pad2d(params["w1"].T, IN_PAD, H_PAD).astype(jnp.bfloat16),    # (896, 256)
        "w2": _pad2d(params["w2"].T, H_PAD, H_PAD).astype(jnp.bfloat16),     # (256, 256)
        "w3": _pad2d(params["w3"].T, H_PAD, OUT_PAD).astype(jnp.bfloat16),   # (256, 128)
        "b1": _pad2d(params["b1"].reshape(1, -1), 1, H_PAD).astype(jnp.float32),
        "b2": _pad2d(params["b2"].reshape(1, -1), 1, H_PAD).astype(jnp.float32),
        "b3": _pad2d(params["b3"].reshape(1, -1), 1, OUT_PAD).astype(jnp.float32),
    }


@functools.partial(jax.jit, static_argnames=("tile_b_max",))
def mlp_forward(x_nchw, prepped, tile_b_max=256):
    """x_nchw: (B, 1, 28, 28). prepped: output of prepare_params. Returns (B, 10) f32."""
    B = x_nchw.shape[0]
    x = x_nchw.reshape(B, -1).astype(jnp.bfloat16)                    # (B, 784)

    # Batch tiling: at least 8 rows (sublane aligned), at most tile_b_max rows per grid step.
    tile_b = min(int(tile_b_max), _round_up(B, 8))
    Bp = _round_up(B, tile_b)
    x = jnp.pad(x, ((0, Bp - B), (0, IN_PAD - IN_RAW)))               # (Bp, 896), zero-padded

    grid = (Bp // tile_b,)

    flops = 2 * Bp * (IN_PAD * H_PAD + H_PAD * H_PAD + H_PAD * OUT_PAD)
    bytes_accessed = (
        Bp * IN_PAD * 2                                               # x (bf16)
        + (IN_PAD * H_PAD + H_PAD * H_PAD + H_PAD * OUT_PAD) * 2      # weights (bf16)
        + (H_PAD + H_PAD + OUT_PAD) * 4                               # biases (f32)
        + Bp * OUT_PAD * 4                                            # output (f32)
    )

    out = pl.pallas_call(
        mlp_kernel,
        out_shape=jax.ShapeDtypeStruct((Bp, OUT_PAD), jnp.float32),
        grid=grid,
        in_specs=[
            pl.BlockSpec((tile_b, IN_PAD), lambda i: (i, 0)),         # x: tiled over batch
            pl.BlockSpec((IN_PAD, H_PAD), lambda i: (0, 0)),          # weights/biases: resident
            pl.BlockSpec((1, H_PAD), lambda i: (0, 0)),
            pl.BlockSpec((H_PAD, H_PAD), lambda i: (0, 0)),
            pl.BlockSpec((1, H_PAD), lambda i: (0, 0)),
            pl.BlockSpec((H_PAD, OUT_PAD), lambda i: (0, 0)),
            pl.BlockSpec((1, OUT_PAD), lambda i: (0, 0)),
        ],
        out_specs=pl.BlockSpec((tile_b, OUT_PAD), lambda i: (i, 0)),
        compiler_params=pltpu.CompilerParams(
            dimension_semantics=("parallel",),                        # megacore split on v7x
            vmem_limit_bytes=32 << 20,
        ),
        cost_estimate=pl.CostEstimate(
            flops=flops, transcendentals=0, bytes_accessed=bytes_accessed
        ),
    )(x, prepped["w1"], prepped["b1"], prepped["w2"], prepped["b2"],
      prepped["w3"], prepped["b3"])

    return out[:B, :OUT_RAW]                                          # (B, 10)


def init_params(key):
    """Deterministic init matching the module's parameter shapes (PyTorch convention).
    linear1: (200, 784), linear2: (200, 200), linear3: (10, 200)."""
    ks = jax.random.split(key, 6)

    def uniform_fan_in(k, shape, fan_in):
        bound = 1.0 / jnp.sqrt(fan_in)
        return jax.random.uniform(k, shape, jnp.float32, -bound, bound)

    return {
        "w1": uniform_fan_in(ks[0], (200, 784), 784.0),
        "b1": uniform_fan_in(ks[1], (200,), 784.0),
        "w2": uniform_fan_in(ks[2], (200, 200), 200.0),
        "b2": uniform_fan_in(ks[3], (200,), 200.0),
        "w3": uniform_fan_in(ks[4], (10, 200), 200.0),
        "b3": uniform_fan_in(ks[5], (10,), 200.0),
    }


def mlp_reference(x_nchw, params):
    """Pure-JAX reference with matching bf16 quantization of inputs/weights/activations
    (f32 accumulation), so the tolerance can stay tight."""
    def q(a):
        return a.astype(jnp.bfloat16).astype(jnp.float32)

    x = q(x_nchw.reshape(x_nchw.shape[0], -1))
    h1 = jnp.maximum(x @ q(params["w1"]).T + params["b1"], 0.0)
    h2 = jnp.maximum(q(h1) @ q(params["w2"]).T + params["b2"], 0.0)
    return q(h2) @ q(params["w3"]).T + params["b3"]


if __name__ == "__main__":
    key = jax.random.PRNGKey(0)
    k_x, k_p = jax.random.split(key)

    # Small batch of MNIST-shaped inputs (NCHW): (2, 1, 28, 28)
    x = jax.random.normal(k_x, (2, 1, 28, 28), jnp.float32)
    params = init_params(k_p)

    prepped = prepare_params(params)          # one-time weight prep (hoisted out of hot path)
    out = mlp_forward(x, prepped)
    out = jax.block_until_ready(out)

    ref = mlp_reference(x, params)
    assert out.shape == (2, 10), out.shape
    assert jnp.allclose(out, ref, atol=1e-2, rtol=1e-2), "mismatch vs reference"

    print("KERNEL_OK")
</pallas_src>

<mosaic_0001>
module attributes {stable_mosaic.version = 11 : i64} {
  func.func @mlp_kernel(%arg0: i32, %arg1: memref<8x896xbf16, #tpu.memory_space<vmem>>, %arg2: memref<896x256xbf16, #tpu.memory_space<vmem>>, %arg3: memref<1x256xf32, #tpu.memory_space<vmem>>, %arg4: memref<256x256xbf16, #tpu.memory_space<vmem>>, %arg5: memref<1x256xf32, #tpu.memory_space<vmem>>, %arg6: memref<256x128xbf16, #tpu.memory_space<vmem>>, %arg7: memref<1x128xf32, #tpu.memory_space<vmem>>, %arg8: memref<8x128xf32, #tpu.memory_space<vmem>>) attributes {dimension_semantics = [#tpu.dimension_semantics<parallel>], iteration_bounds = array<i64: 1>, scalar_prefetch = 0 : i64, scratch_operands = 0 : i64, tpu.core_type = #tpu.core_type<tc>, window_params = [{transform_indices = @transform_0, window_bounds = array<i64: 8, 896>}, {pipeline_mode = #tpu.pipeline_mode<synchronous>, transform_indices = @transform_1, window_bounds = array<i64: 896, 256>}, {pipeline_mode = #tpu.pipeline_mode<synchronous>, transform_indices = @transform_2, window_bounds = array<i64: 1, 256>}, {pipeline_mode = #tpu.pipeline_mode<synchronous>, transform_indices = @transform_3, window_bounds = array<i64: 256, 256>}, {pipeline_mode = #tpu.pipeline_mode<synchronous>, transform_indices = @transform_4, window_bounds = array<i64: 1, 256>}, {pipeline_mode = #tpu.pipeline_mode<synchronous>, transform_indices = @transform_5, window_bounds = array<i64: 256, 128>}, {pipeline_mode = #tpu.pipeline_mode<synchronous>, transform_indices = @transform_6, window_bounds = array<i64: 1, 128>}, {transform_indices = @transform_7, window_bounds = array<i64: 8, 128>}]} {
    %c0 = arith.constant 0 : index
    %c0_0 = arith.constant 0 : index
    %0 = vector.load %arg1[%c0, %c0_0] : memref<8x896xbf16, #tpu.memory_space<vmem>>, vector<8x896xbf16>
    %c0_1 = arith.constant 0 : index
    %c0_2 = arith.constant 0 : index
    %1 = vector.load %arg2[%c0_1, %c0_2] : memref<896x256xbf16, #tpu.memory_space<vmem>>, vector<896x256xbf16>
    %cst = arith.constant dense<0.000000e+00> : vector<8x256xf32>
    %2 = tpu.matmul %0, %1, %cst {dimension_numbers = #tpu.dot_dimension_numbers<[1], [0], [0], [1], [0, 0, 1, 1], [], []>} : vector<8x896xbf16>, vector<896x256xbf16>, vector<8x256xf32> -> vector<8x256xf32>
    %c0_3 = arith.constant 0 : index
    %c0_4 = arith.constant 0 : index
    %3 = vector.load %arg3[%c0_3, %c0_4] : memref<1x256xf32, #tpu.memory_space<vmem>>, vector<1x256xf32>
    %4 = vector.broadcast %3 : vector<1x256xf32> to vector<8x256xf32>
    %5 = arith.addf %2, %4 : vector<8x256xf32>
    %cst_5 = arith.constant 0.000000e+00 : f32
    %6 = vector.broadcast %cst_5 : f32 to vector<8x256xf32>
    %7 = arith.maximumf %5, %6 : vector<8x256xf32>
    %8 = arith.truncf %7 : vector<8x256xf32> to vector<8x256xbf16>
    %c0_6 = arith.constant 0 : index
    %c0_7 = arith.constant 0 : index
    %9 = vector.load %arg4[%c0_6, %c0_7] : memref<256x256xbf16, #tpu.memory_space<vmem>>, vector<256x256xbf16>
    %cst_8 = arith.constant dense<0.000000e+00> : vector<8x256xf32>
    %10 = tpu.matmul %8, %9, %cst_8 {dimension_numbers = #tpu.dot_dimension_numbers<[1], [0], [0], [1], [0, 0, 1, 1], [], []>} : vector<8x256xbf16>, vector<256x256xbf16>, vector<8x256xf32> -> vector<8x256xf32>
    %c0_9 = arith.constant 0 : index
    %c0_10 = arith.constant 0 : index
    %11 = vector.load %arg5[%c0_9, %c0_10] : memref<1x256xf32, #tpu.memory_space<vmem>>, vector<1x256xf32>
    %12 = vector.broadcast %11 : vector<1x256xf32> to vector<8x256xf32>
    %13 = arith.addf %10, %12 : vector<8x256xf32>
    %cst_11 = arith.constant 0.000000e+00 : f32
    %14 = vector.broadcast %cst_11 : f32 to vector<8x256xf32>
    %15 = arith.maximumf %13, %14 : vector<8x256xf32>
    %16 = arith.truncf %15 : vector<8x256xf32> to vector<8x256xbf16>
    %c0_12 = arith.constant 0 : index
    %c0_13 = arith.constant 0 : index
    %17 = vector.load %arg6[%c0_12, %c0_13] : memref<256x128xbf16, #tpu.memory_space<vmem>>, vector<256x128xbf16>
    %cst_14 = arith.constant dense<0.000000e+00> : vector<8x128xf32>
    %18 = tpu.matmul %16, %17, %cst_14 {dimension_numbers = #tpu.dot_dimension_numbers<[1], [0], [0], [1], [0, 0, 1, 1], [], []>} : vector<8x256xbf16>, vector<256x128xbf16>, vector<8x128xf32> -> vector<8x128xf32>
    %c0_15 = arith.constant 0 : index
    %c0_16 = arith.constant 0 : index
    %19 = vector.load %arg7[%c0_15, %c0_16] : memref<1x128xf32, #tpu.memory_space<vmem>>, vector<1x128xf32>
    %20 = vector.broadcast %19 : vector<1x128xf32> to vector<8x128xf32>
    %21 = arith.addf %18, %20 : vector<8x128xf32>
    %c0_17 = arith.constant 0 : index
    %c0_18 = arith.constant 0 : index
    %22 = vector.load %arg8[%c0_17, %c0_18] : memref<8x128xf32, #tpu.memory_space<vmem>>, vector<8x128xf32>
    tpu.vector_store %arg8[%c0_17, %c0_18], %21 {strides = array<i32>} : memref<8x128xf32, #tpu.memory_space<vmem>>, vector<8x128xf32>,
    return
  }
  func.func @transform_0(%arg0: i32) -> (i32, i32) {
    %c0_i32 = arith.constant 0 : i32
    %c0_i32_0 = arith.constant 0 : i32
    return %arg0, %c0_i32 : i32, i32
  }
  func.func @transform_1(%arg0: i32) -> (i32, i32) {
    %c0_i32 = arith.constant 0 : i32
    %c0_i32_0 = arith.constant 0 : i32
    %c0_i32_1 = arith.constant 0 : i32
    return %c0_i32, %c0_i32_0 : i32, i32
  }
  func.func @transform_2(%arg0: i32) -> (i32, i32) {
    %c0_i32 = arith.constant 0 : i32
    %c0_i32_0 = arith.constant 0 : i32
    %c0_i32_1 = arith.constant 0 : i32
    return %c0_i32, %c0_i32_0 : i32, i32
  }
  func.func @transform_3(%arg0: i32) -> (i32, i32) {
    %c0_i32 = arith.constant 0 : i32
    %c0_i32_0 = arith.constant 0 : i32
    %c0_i32_1 = arith.constant 0 : i32
    return %c0_i32, %c0_i32_0 : i32, i32
  }
  func.func @transform_4(%arg0: i32) -> (i32, i32) {
    %c0_i32 = arith.constant 0 : i32
    %c0_i32_0 = arith.constant 0 : i32
    %c0_i32_1 = arith.constant 0 : i32
    return %c0_i32, %c0_i32_0 : i32, i32
  }
  func.func @transform_5(%arg0: i32) -> (i32, i32) {
    %c0_i32 = arith.constant 0 : i32
    %c0_i32_0 = arith.constant 0 : i32
    %c0_i32_1 = arith.constant 0 : i32
    return %c0_i32, %c0_i32_0 : i32, i32
  }
  func.func @transform_6(%arg0: i32) -> (i32, i32) {
    %c0_i32 = arith.constant 0 : i32
    %c0_i32_0 = arith.constant 0 : i32
    %c0_i32_1 = arith.constant 0 : i32
    return %c0_i32, %c0_i32_0 : i32, i32
  }
  func.func @transform_7(%arg0: i32) -> (i32, i32) {
    %c0_i32 = arith.constant 0 : i32
    %c0_i32_0 = arith.constant 0 : i32
    return %arg0, %c0_i32 : i32, i32
  }
}

</mosaic_0001>

<llo_original>
// kernel: mlp_forward.1
$region0: #{mlp_forward.1}
  #allocation0 [shape = 'u32[]', space=smem, size = 0x4, offset = 0x4, fixed_abs, tag = 'smem constant byte address 0x4 - core index']
  #allocation1 [shape = 'u32[144,128]{1,0:T(1,128)}', space=vmem, size = 0x12000, scoped, tag = 'internal scratch']
  %s0 = inlined_call_operand.vmem [shape: bf16[8,896], index: 0, kind: input, shape index: {}]
  %s1 = inlined_call_operand.hbm [shape: bf16[896,256], index: 1, kind: input, shape index: {}]
  %s2 = inlined_call_operand.vmem [shape: f32[1,256], index: 2, kind: input, shape index: {}]
  %s3 = inlined_call_operand.hbm [shape: bf16[256,256], index: 3, kind: input, shape index: {}]
  %s4 = inlined_call_operand.vmem [shape: f32[1,256], index: 4, kind: input, shape index: {}]
  %s5 = inlined_call_operand.vmem [shape: bf16[256,128], index: 5, kind: input, shape index: {}]
  %s6 = inlined_call_operand.vmem [shape: f32[1,128], index: 6, kind: input, shape index: {}]
  %s7 = inlined_call_operand.vmem [shape: f32[8,128], index: 7, kind: output, shape index: {}]
  %s8 = sld [smem:[#allocation0]]
  $region46: #{mlp_forward.1} parent=0
    _
  %s10 = ssub.s32 1, %s8
  %s11 = scalar_select 0, %s10, %s8
  $region1: #{mlp_forward.1} parent=0
    #allocation2 [shape = 'u8[458752]{0}', space=vmem, size = 0x70000, scoped, tag = 'input window, operand 1, single buffered']
    #allocation3 [shape = 's32[1]{0}', space=sflag, size = 0x4, scoped, tag = 'scoped memory for mlp_forward.1']
    #allocation4 [shape = 'u8[131072]{0}', space=vmem, size = 0x20000, scoped, tag = 'input window, operand 3, single buffered']
    #allocation5 [shape = 's32[1]{0}', space=sflag, size = 0x4, scoped, tag = 'scoped memory for mlp_forward.1']
    %12 = vsyncpa [#allocation3], 0
    %13 = vsyncpa [#allocation5], 0
    // Predicated region
    $region2: #{mlp_forward.1} parent=1 // pred_check
      _
    $region3: #{mlp_forward.1} parent=1 // pred_check_branch
      %15 = sbr.rel (0) target = $region5
    $region4: #{mlp_forward.1} parent=1 // pred_region
      _
    $region5: #{mlp_forward.1} parent=1 // pred_fallthru
      _
    // Predicated region
    $region6: #{mlp_forward.1} parent=1 // pred_check
      _
    $region7: #{mlp_forward.1} parent=1 // pred_check_branch
      %17 = sbr.rel (0) target = $region9
    $region8: #{mlp_forward.1} parent=1 // pred_region
      %s19 = ssub.s32 14336, 14336
      %20 = vsyncadd [#allocation3], %s19
      %s21 = sshll.u32 [#allocation2], 4
      %s22 = int_to_ptr.vmem [resolvable:$true] %s21
      %27 = dma.hbm_to_vmem [thread:$0]  %s1, 14336, %s22, [#allocation3], 128, 128, 8
    $region9: #{mlp_forward.1} parent=1 // pred_fallthru
      _
    // Predicated region
    $region10: #{mlp_forward.1} parent=1 // pred_check
      _
    $region11: #{mlp_forward.1} parent=1 // pred_check_branch
      %29 = sbr.rel (0) target = $region13
    $region12: #{mlp_forward.1} parent=1 // pred_region
      _
    $region13: #{mlp_forward.1} parent=1 // pred_fallthru
      _
    // Predicated region
    $region14: #{mlp_forward.1} parent=1 // pred_check
      _
    $region15: #{mlp_forward.1} parent=1 // pred_check_branch
      %31 = sbr.rel (0) target = $region17
    $region16: #{mlp_forward.1} parent=1 // pred_region
      %s33 = ssub.s32 4096, 4096
      %34 = vsyncadd [#allocation5], %s33
      %s35 = sshll.u32 [#allocation4], 4
      %s36 = int_to_ptr.vmem [resolvable:$true] %s35
      %41 = dma.hbm_to_vmem [thread:$0]  %s3, 4096, %s36, [#allocation5], 128, 128, 8
    $region17: #{mlp_forward.1} parent=1 // pred_fallthru
      _
    // Predicated region
    $region18: #{mlp_forward.1} parent=1 // pred_check
      _
    $region19: #{mlp_forward.1} parent=1 // pred_check_branch
      %43 = sbr.rel (0) target = $region21
    $region20: #{mlp_forward.1} parent=1 // pred_region
      _
    $region21: #{mlp_forward.1} parent=1 // pred_fallthru
      _
    // Predicated region
    $region22: #{mlp_forward.1} parent=1 // pred_check
      _
    $region23: #{mlp_forward.1} parent=1 // pred_check_branch
      %45 = sbr.rel (0) target = $region25
    $region24: #{mlp_forward.1} parent=1 // pred_region
      _
    $region25: #{mlp_forward.1} parent=1 // pred_fallthru
      _
    // Predicated region
    $region26: #{mlp_forward.1} parent=1 // pred_check
      _
    $region27: #{mlp_forward.1} parent=1 // pred_check_branch
      %47 = sbr.rel (0) target = $region29
    $region28: #{mlp_forward.1} parent=1 // pred_region
      _
    $region29: #{mlp_forward.1} parent=1 // pred_fallthru
      _
    // Predicated region
    $region30: #{mlp_forward.1} parent=1 // pred_check
      _
    $region31: #{mlp_forward.1} parent=1 // pred_check_branch
      %49 = sbr.rel (0) target = $region33
    $region32: #{mlp_forward.1} parent=1 // pred_region
      %50 = dma.done [#allocation3], 14336
    $region33: #{mlp_forward.1} parent=1 // pred_fallthru
      _
    // Predicated region
    $region34: #{mlp_forward.1} parent=1 // pred_check
      _
    $region35: #{mlp_forward.1} parent=1 // pred_check_branch
      %52 = sbr.rel (0) target = $region37
    $region36: #{mlp_forward.1} parent=1 // pred_region
      %53 = dma.done [#allocation5], 4096
    $region37: #{mlp_forward.1} parent=1 // pred_fallthru
      _
    %v55 = vld [vmem:[%s0] sm:$0xff]
    %v56 = vld [vmem:[%s0 + $0x8] sm:$0xff]
    %v57 = vld [vmem:[%s0 + $0x10] sm:$0xff]
    %v58 = vld [vmem:[%s0 + $0x18] sm:$0xf]
    %v59 = vld [vmem:[#allocation2] sm:$0xff]
    %v60 = vld [vmem:[#allocation2 + $0x8] sm:$0xff]
    %v61 = vld [vmem:[#allocation2 + $0x10] sm:$0xff]
    %v62 = vld [vmem:[#allocation2 + $0x18] sm:$0xff]
    %v63 = vld [vmem:[#allocation2 + $0x20] sm:$0xff]
    %v64 = vld [vmem:[#allocation2 + $0x28] sm:$0xff]
    %v65 = vld [vmem:[#allocation2 + $0x30] sm:$0xff]
    %v66 = vld [vmem:[#allocation2 + $0x38] sm:$0xff]
    %v67 = vld [vmem:[#allocation2 + $0x40] sm:$0xff]
    %v68 = vld [vmem:[#allocation2 + $0x48] sm:$0xff]
    %v69 = vld [vmem:[#allocation2 + $0x50] sm:$0xff]
    %v70 = vld [vmem:[#allocation2 + $0x58] sm:$0xff]
    %v71 = vld [vmem:[#allocation2 + $0x60] sm:$0xff]
    %v72 = vld [vmem:[#allocation2 + $0x68] sm:$0xff]
    %v73 = vld [vmem:[#allocation2 + $0x70] sm:$0xff]
    %v74 = vld [vmem:[#allocation2 + $0x78] sm:$0xff]
    %v75 = vld [vmem:[#allocation2 + $0x80] sm:$0xff]
    %v76 = vld [vmem:[#allocation2 + $0x88] sm:$0xff]
    %v77 = vld [vmem:[#allocation2 + $0x90] sm:$0xff]
    %v78 = vld [vmem:[#allocation2 + $0x98] sm:$0xff]
    %v79 = vld [vmem:[#allocation2 + $0xa0] sm:$0xff]
    %v80 = vld [vmem:[#allocation2 + $0xa8] sm:$0xff]
    %v81 = vld [vmem:[#allocation2 + $0xb0] sm:$0xff]
    %v82 = vld [vmem:[#allocation2 + $0xb8] sm:$0xff]
    %v83 = vld [vmem:[#allocation2 + $0xc0] sm:$0xff]
    %v84 = vld [vmem:[#allocation2 + $0xc8] sm:$0xff]
    %v85 = vld [vmem:[#allocation2 + $0xd0] sm:$0xff]
    %v86 = vld [vmem:[#allocation2 + $0xd8] sm:$0xff]
    %v87 = vld [vmem:[#allocation2 + $0xe0] sm:$0xff]
    %v88 = vld [vmem:[#allocation2 + $0xe8] sm:$0xff]
    %v89 = vld [vmem:[#allocation2 + $0xf0] sm:$0xff]
    %v90 = vld [vmem:[#allocation2 + $0xf8] sm:$0xff]
    %v91 = vld [vmem:[#allocation2 + $0x100] sm:$0xff]
    %v92 = vld [vmem:[#allocation2 + $0x108] sm:$0xff]
    %v93 = vld [vmem:[#allocation2 + $0x110] sm:$0xff]
    %v94 = vld [vmem:[#allocation2 + $0x118] sm:$0xff]
    %v95 = vld [vmem:[#allocation2 + $0x120] sm:$0xff]
    %v96 = vld [vmem:[#allocation2 + $0x128] sm:$0xff]
    %v97 = vld [vmem:[#allocation2 + $0x130] sm:$0xff]
    %v98 = vld [vmem:[#allocation2 + $0x138] sm:$0xff]
    %v99 = vld [vmem:[#allocation2 + $0x140] sm:$0xff]
    %v100 = vld [vmem:[#allocation2 + $0x148] sm:$0xff]
    %v101 = vld [vmem:[#allocation2 + $0x150] sm:$0xff]
    %v102 = vld [vmem:[#allocation2 + $0x158] sm:$0xff]
    %v103 = vld [vmem:[#allocation2 + $0x160] sm:$0xff]
    %v104 = vld [vmem:[#allocation2 + $0x168] sm:$0xff]
    %v105 = vld [vmem:[#allocation2 + $0x170] sm:$0xff]
    %v106 = vld [vmem:[#allocation2 + $0x178] sm:$0xff]
    %v107 = vld [vmem:[#allocation2 + $0x180] sm:$0xff]
    %v108 = vld [vmem:[#allocation2 + $0x188] sm:$0xff]
    %v109 = vld [vmem:[#allocation2 + $0x190] sm:$0xff]
    %v110 = vld [vmem:[#allocation2 + $0x198] sm:$0xff]
    %v111 = vld [vmem:[#allocation2 + $0x1a0] sm:$0xff]
    %v112 = vld [vmem:[#allocation2 + $0x1a8] sm:$0xff]
    %v113 = vld [vmem:[#allocation2 + $0x1b0] sm:$0xff]
    %v114 = vld [vmem:[#allocation2 + $0x1b8] sm:$0xff]
    %v115 = vld [vmem:[#allocation2 + $0x1c0] sm:$0xff]
    %v116 = vld [vmem:[#allocation2 + $0x1c8] sm:$0xff]
    %v117 = vld [vmem:[#allocation2 + $0x1d0] sm:$0xff]
    %v118 = vld [vmem:[#allocation2 + $0x1d8] sm:$0xff]
    %v119 = vld [vmem:[#allocation2 + $0x1e0] sm:$0xff]
    %v120 = vld [vmem:[#allocation2 + $0x1e8] sm:$0xff]
    %v121 = vld [vmem:[#allocation2 + $0x1f0] sm:$0xff]
    %v122 = vld [vmem:[#allocation2 + $0x1f8] sm:$0xff]
    %v123 = vld [vmem:[#allocation2 + $0x200] sm:$0xff]
    %v124 = vld [vmem:[#allocation2 + $0x208] sm:$0xff]
    %v125 = vld [vmem:[#allocation2 + $0x210] sm:$0xff]
    %v126 = vld [vmem:[#allocation2 + $0x218] sm:$0xff]
    %v127 = vld [vmem:[#allocation2 + $0x220] sm:$0xff]
    %v128 = vld [vmem:[#allocation2 + $0x228] sm:$0xff]
    %v129 = vld [vmem:[#allocation2 + $0x230] sm:$0xff]
    %v130 = vld [vmem:[#allocation2 + $0x238] sm:$0xff]
    %v131 = vld [vmem:[#allocation2 + $0x240] sm:$0xff]
    %v132 = vld [vmem:[#allocation2 + $0x248] sm:$0xff]
    %v133 = vld [vmem:[#allocation2 + $0x250] sm:$0xff]
    %v134 = vld [vmem:[#allocation2 + $0x258] sm:$0xff]
    %v135 = vld [vmem:[#allocation2 + $0x260] sm:$0xff]
    %v136 = vld [vmem:[#allocation2 + $0x268] sm:$0xff]
    %v137 = vld [vmem:[#allocation2 + $0x270] sm:$0xff]
    %v138 = vld [vmem:[#allocation2 + $0x278] sm:$0xff]
    %v139 = vld [vmem:[#allocation2 + $0x280] sm:$0xff]
    %v140 = vld [vmem:[#allocation2 + $0x288] sm:$0xff]
    %v141 = vld [vmem:[#allocation2 + $0x290] sm:$0xff]
    %v142 = vld [vmem:[#allocation2 + $0x298] sm:$0xff]
    %v143 = vld [vmem:[#allocation2 + $0x2a0] sm:$0xff]
    %v144 = vld [vmem:[#allocation2 + $0x2a8] sm:$0xff]
    %v145 = vld [vmem:[#allocation2 + $0x2b0] sm:$0xff]
    %v146 = vld [vmem:[#allocation2 + $0x2b8] sm:$0xff]
    %v147 = vld [vmem:[#allocation2 + $0x2c0] sm:$0xff]
    %v148 = vld [vmem:[#allocation2 + $0x2c8] sm:$0xff]
    %v149 = vld [vmem:[#allocation2 + $0x2d0] sm:$0xff]
    %v150 = vld [vmem:[#allocation2 + $0x2d8] sm:$0xff]
    %v151 = vld [vmem:[#allocation2 + $0x2e0] sm:$0xff]
    %v152 = vld [vmem:[#allocation2 + $0x2e8] sm:$0xff]
    %v153 = vld [vmem:[#allocation2 + $0x2f0] sm:$0xff]
    %v154 = vld [vmem:[#allocation2 + $0x2f8] sm:$0xff]
    %v155 = vld [vmem:[#allocation2 + $0x300] sm:$0xff]
    %v156 = vld [vmem:[#allocation2 + $0x308] sm:$0xff]
    %v157 = vld [vmem:[#allocation2 + $0x310] sm:$0xff]
    %v158 = vld [vmem:[#allocation2 + $0x318] sm:$0xff]
    %v159 = vld [vmem:[#allocation2 + $0x320] sm:$0xff]
    %v160 = vld [vmem:[#allocation2 + $0x328] sm:$0xff]
    %v161 = vld [vmem:[#allocation2 + $0x330] sm:$0xff]
    %v162 = vld [vmem:[#allocation2 + $0x338] sm:$0xff]
    %v163 = vld [vmem:[#allocation2 + $0x340] sm:$0xff]
    %v164 = vld [vmem:[#allocation2 + $0x348] sm:$0xff]
    %v165 = vld [vmem:[#allocation2 + $0x350] sm:$0xff]
    %v166 = vld [vmem:[#allocation2 + $0x358] sm:$0xff]
    %v167 = vld [vmem:[#allocation2 + $0x360] sm:$0xff]
    %v168 = vld [vmem:[#allocation2 + $0x368] sm:$0xff]
    %v169 = vld [vmem:[#allocation2 + $0x370] sm:$0xff]
    %v170 = vld [vmem:[#allocation2 + $0x378] sm:$0xff]
    %v171 = vld [vmem:[%s2] sm:$0x3]
    %v173 = vlaneseq
    %v174 = vshrl.u32 %v173, 7
    %v175 = vsub.s32 0, %v174
    %v176 = vrot.slane %v171, %v175
    %v177 = vlaneseq
    %v178 = vshrl.u32 %v177, 7
    %v179 = vsub.s32 1, %v178
    %v180 = vrot.slane %v171, %v179
    %v187 = vunpack.c.l.b16 %v55
    %v188 = vunpack.c.h.b16 %v55
    %v189 = vunpack.c.l.b16 %v56
    %v190 = vunpack.c.h.b16 %v56
    %v191 = vunpack.c.l.b16 %v57
    %v192 = vunpack.c.h.b16 %v57
    %v193 = vunpack.c.l.b16 %v58
    %v194 = vpack.c.b16 %v187, %v187
    %v195 = vpack.c.b16 %v188, %v188
    %v196 = vpack.c.b16 %v189, %v189
    %v197 = vpack.c.b16 %v190, %v190
    %v198 = vpack.c.b16 %v191, %v191
    %v199 = vpack.c.b16 %v192, %v192
    %v200 = vpack.c.b16 %v193, %v193
    %v320 = vunpack.c.l.b16 %v59
    %v321 = vunpack.c.h.b16 %v59
    %v322 = vunpack.c.l.b16 %v60
    %v323 = vunpack.c.h.b16 %v60
    %v324 = vunpack.c.l.b16 %v61
    %v325 = vunpack.c.h.b16 %v61
    %v326 = vunpack.c.l.b16 %v62
    %v327 = vunpack.c.h.b16 %v62
    %v328 = vunpack.c.l.b16 %v63
    %v329 = vunpack.c.h.b16 %v63
    %v330 = vunpack.c.l.b16 %v64
    %v331 = vunpack.c.h.b16 %v64
    %v332 = vunpack.c.l.b16 %v65
    %v333 = vunpack.c.h.b16 %v65
    %v334 = vunpack.c.l.b16 %v66
    %v335 = vunpack.c.h.b16 %v66
    %v336 = vunpack.c.l.b16 %v67
    %v337 = vunpack.c.h.b16 %v67
    %v338 = vunpack.c.l.b16 %v68
    %v339 = vunpack.c.h.b16 %v68
    %v340 = vunpack.c.l.b16 %v69
    %v341 = vunpack.c.h.b16 %v69
    %v342 = vunpack.c.l.b16 %v70
    %v343 = vunpack.c.h.b16 %v70
    %v344 = vunpack.c.l.b16 %v71
    %v345 = vunpack.c.h.b16 %v71
    %v346 = vunpack.c.l.b16 %v72
    %v347 = vunpack.c.h.b16 %v72
    %v348 = vunpack.c.l.b16 %v73
    %v349 = vunpack.c.h.b16 %v73
    %v350 = vunpack.c.l.b16 %v74
    %v351 = vunpack.c.h.b16 %v74
    %v352 = vunpack.c.l.b16 %v75
    %v353 = vunpack.c.h.b16 %v75
    %v354 = vunpack.c.l.b16 %v76
    %v355 = vunpack.c.h.b16 %v76
    %v356 = vunpack.c.l.b16 %v77
    %v357 = vunpack.c.h.b16 %v77
    %v358 = vunpack.c.l.b16 %v78
    %v359 = vunpack.c.h.b16 %v78
    %v360 = vunpack.c.l.b16 %v79
    %v361 = vunpack.c.h.b16 %v79
    %v362 = vunpack.c.l.b16 %v80
    %v363 = vunpack.c.h.b16 %v80
    %v364 = vunpack.c.l.b16 %v81
    %v365 = vunpack.c.h.b16 %v81
    %v366 = vunpack.c.l.b16 %v82
    %v367 = vunpack.c.h.b16 %v82
    %v368 = vunpack.c.l.b16 %v83
    %v369 = vunpack.c.h.b16 %v83
    %v370 = vunpack.c.l.b16 %v84
    %v371 = vunpack.c.h.b16 %v84
    %v372 = vunpack.c.l.b16 %v85
    %v373 = vunpack.c.h.b16 %v85
    %v374 = vunpack.c.l.b16 %v86
    %v375 = vunpack.c.h.b16 %v86
    %v376 = vunpack.c.l.b16 %v87
    %v377 = vunpack.c.h.b16 %v87
    %v378 = vunpack.c.l.b16 %v88
    %v379 = vunpack.c.h.b16 %v88
    %v380 = vunpack.c.l.b16 %v89
    %v381 = vunpack.c.h.b16 %v89
    %v382 = vunpack.c.l.b16 %v90
    %v383 = vunpack.c.h.b16 %v90
    %v384 = vunpack.c.l.b16 %v91
    %v385 = vunpack.c.h.b16 %v91
    %v386 = vunpack.c.l.b16 %v92
    %v387 = vunpack.c.h.b16 %v92
    %v388 = vunpack.c.l.b16 %v93
    %v389 = vunpack.c.h.b16 %v93
    %v390 = vunpack.c.l.b16 %v94
    %v391 = vunpack.c.h.b16 %v94
    %v392 = vunpack.c.l.b16 %v95
    %v393 = vunpack.c.h.b16 %v95
    %v394 = vunpack.c.l.b16 %v96
    %v395 = vunpack.c.h.b16 %v96
    %v396 = vunpack.c.l.b16 %v97
    %v397 = vunpack.c.h.b16 %v97
    %v398 = vunpack.c.l.b16 %v98
    %v399 = vunpack.c.h.b16 %v98
    %v400 = vunpack.c.l.b16 %v99
    %v401 = vunpack.c.h.b16 %v99
    %v402 = vunpack.c.l.b16 %v100
    %v403 = vunpack.c.h.b16 %v100
    %v404 = vunpack.c.l.b16 %v101
    %v405 = vunpack.c.h.b16 %v101
    %v406 = vunpack.c.l.b16 %v102
    %v407 = vunpack.c.h.b16 %v102
    %v408 = vunpack.c.l.b16 %v103
    %v409 = vunpack.c.h.b16 %v103
    %v410 = vunpack.c.l.b16 %v104
    %v411 = vunpack.c.h.b16 %v104
    %v412 = vunpack.c.l.b16 %v105
    %v413 = vunpack.c.h.b16 %v105
    %v414 = vunpack.c.l.b16 %v106
    %v415 = vunpack.c.h.b16 %v106
    %v416 = vunpack.c.l.b16 %v107
    %v417 = vunpack.c.h.b16 %v107
    %v418 = vunpack.c.l.b16 %v108
    %v419 = vunpack.c.h.b16 %v108
    %v420 = vunpack.c.l.b16 %v109
    %v421 = vunpack.c.h.b16 %v109
    %v422 = vunpack.c.l.b16 %v110
    %v423 = vunpack.c.h.b16 %v110
    %v424 = vunpack.c.l.b16 %v111
    %v425 = vunpack.c.h.b16 %v111
    %v426 = vunpack.c.l.b16 %v112
    %v427 = vunpack.c.h.b16 %v112
    %v428 = vunpack.c.l.b16 %v113
    %v429 = vunpack.c.h.b16 %v113
    %v430 = vunpack.c.l.b16 %v114
    %v431 = vunpack.c.h.b16 %v114
    %v432 = vunpack.c.l.b16 %v115
    %v433 = vunpack.c.h.b16 %v115
    %v434 = vunpack.c.l.b16 %v116
    %v435 = vunpack.c.h.b16 %v116
    %v436 = vunpack.c.l.b16 %v117
    %v437 = vunpack.c.h.b16 %v117
    %v438 = vunpack.c.l.b16 %v118
    %v439 = vunpack.c.h.b16 %v118
    %v440 = vunpack.c.l.b16 %v119
    %v441 = vunpack.c.h.b16 %v119
    %v442 = vunpack.c.l.b16 %v120
    %v443 = vunpack.c.h.b16 %v120
    %v444 = vunpack.c.l.b16 %v121
    %v445 = vunpack.c.h.b16 %v121
    %v446 = vunpack.c.l.b16 %v122
    %v447 = vunpack.c.h.b16 %v122
    %v448 = vunpack.c.l.b16 %v123
    %v449 = vunpack.c.h.b16 %v123
    %v450 = vunpack.c.l.b16 %v124
    %v451 = vunpack.c.h.b16 %v124
    %v452 = vunpack.c.l.b16 %v125
    %v453 = vunpack.c.h.b16 %v125
    %v454 = vunpack.c.l.b16 %v126
    %v455 = vunpack.c.h.b16 %v126
    %v456 = vunpack.c.l.b16 %v127
    %v457 = vunpack.c.h.b16 %v127
    %v458 = vunpack.c.l.b16 %v128
    %v459 = vunpack.c.h.b16 %v128
    %v460 = vunpack.c.l.b16 %v129
    %v461 = vunpack.c.h.b16 %v129
    %v462 = vunpack.c.l.b16 %v130
    %v463 = vunpack.c.h.b16 %v130
    %v464 = vunpack.c.l.b16 %v131
    %v465 = vunpack.c.h.b16 %v131
    %v466 = vunpack.c.l.b16 %v132
    %v467 = vunpack.c.h.b16 %v132
    %v468 = vunpack.c.l.b16 %v133
    %v469 = vunpack.c.h.b16 %v133
    %v470 = vunpack.c.l.b16 %v134
    %v471 = vunpack.c.h.b16 %v134
    %v472 = vunpack.c.l.b16 %v135
    %v473 = vunpack.c.h.b16 %v135
    %v474 = vunpack.c.l.b16 %v136
    %v475 = vunpack.c.h.b16 %v136
    %v476 = vunpack.c.l.b16 %v137
    %v477 = vunpack.c.h.b16 %v137
    %v478 = vunpack.c.l.b16 %v138
    %v479 = vunpack.c.h.b16 %v138
    %v480 = vunpack.c.l.b16 %v139
    %v481 = vunpack.c.h.b16 %v139
    %v482 = vunpack.c.l.b16 %v140
    %v483 = vunpack.c.h.b16 %v140
    %v484 = vunpack.c.l.b16 %v141
    %v485 = vunpack.c.h.b16 %v141
    %v486 = vunpack.c.l.b16 %v142
    %v487 = vunpack.c.h.b16 %v142
    %v488 = vunpack.c.l.b16 %v143
    %v489 = vunpack.c.h.b16 %v143
    %v490 = vunpack.c.l.b16 %v144
    %v491 = vunpack.c.h.b16 %v144
    %v492 = vunpack.c.l.b16 %v145
    %v493 = vunpack.c.h.b16 %v145
    %v494 = vunpack.c.l.b16 %v146
    %v495 = vunpack.c.h.b16 %v146
    %v496 = vunpack.c.l.b16 %v147
    %v497 = vunpack.c.h.b16 %v147
    %v498 = vunpack.c.l.b16 %v148
    %v499 = vunpack.c.h.b16 %v148
    %v500 = vunpack.c.l.b16 %v149
    %v501 = vunpack.c.h.b16 %v149
    %v502 = vunpack.c.l.b16 %v150
    %v503 = vunpack.c.h.b16 %v150
    %v504 = vunpack.c.l.b16 %v151
    %v505 = vunpack.c.h.b16 %v151
    %v506 = vunpack.c.l.b16 %v152
    %v507 = vunpack.c.h.b16 %v152
    %v508 = vunpack.c.l.b16 %v153
    %v509 = vunpack.c.h.b16 %v153
    %v510 = vunpack.c.l.b16 %v154
    %v511 = vunpack.c.h.b16 %v154
    %v512 = vunpack.c.l.b16 %v155
    %v513 = vunpack.c.h.b16 %v155
    %v514 = vunpack.c.l.b16 %v156
    %v515 = vunpack.c.h.b16 %v156
    %v516 = vunpack.c.l.b16 %v157
    %v517 = vunpack.c.h.b16 %v157
    %v518 = vunpack.c.l.b16 %v158
    %v519 = vunpack.c.h.b16 %v158
    %v520 = vunpack.c.l.b16 %v159
    %v521 = vunpack.c.h.b16 %v159
    %v522 = vunpack.c.l.b16 %v160
    %v523 = vunpack.c.h.b16 %v160
    %v524 = vunpack.c.l.b16 %v161
    %v525 = vunpack.c.h.b16 %v161
    %v526 = vunpack.c.l.b16 %v162
    %v527 = vunpack.c.h.b16 %v162
    %v528 = vunpack.c.l.b16 %v163
    %v529 = vunpack.c.h.b16 %v163
    %v530 = vunpack.c.l.b16 %v164
    %v531 = vunpack.c.h.b16 %v164
    %v532 = vunpack.c.l.b16 %v165
    %v533 = vunpack.c.h.b16 %v165
    %v534 = vunpack.c.l.b16 %v166
    %v535 = vunpack.c.h.b16 %v166
    %v536 = vunpack.c.l.b16 %v167
    %v537 = vunpack.c.h.b16 %v167
    %v538 = vunpack.c.l.b16 %v168
    %v539 = vunpack.c.h.b16 %v168
    %v540 = vunpack.c.l.b16 %v169
    %v541 = vunpack.c.h.b16 %v169
    %v542 = vunpack.c.l.b16 %v170
    %v543 = vunpack.c.h.b16 %v170
    %v544 = vpack.c.b16 %v322, %v320
    %v545 = vpack.c.b16 %v323, %v321
    %v546 = vpack.c.b16 %v326, %v324
    %v547 = vpack.c.b16 %v327, %v325
    %v548 = vpack.c.b16 %v330, %v328
    %v549 = vpack.c.b16 %v331, %v329
    %v550 = vpack.c.b16 %v334, %v332
    %v551 = vpack.c.b16 %v335, %v333
    %v552 = vpack.c.b16 %v338, %v336
    %v553 = vpack.c.b16 %v339, %v337
    %v554 = vpack.c.b16 %v342, %v340
    %v555 = vpack.c.b16 %v343, %v341
    %v556 = vpack.c.b16 %v346, %v344
    %v557 = vpack.c.b16 %v347, %v345
    %v558 = vpack.c.b16 %v350, %v348
    %v559 = vpack.c.b16 %v351, %v349
    %v560 = vpack.c.b16 %v354, %v352
    %v561 = vpack.c.b16 %v355, %v353
    %v562 = vpack.c.b16 %v358, %v356
    %v563 = vpack.c.b16 %v359, %v357
    %v564 = vpack.c.b16 %v362, %v360
    %v565 = vpack.c.b16 %v363, %v361
    %v566 = vpack.c.b16 %v366, %v364
    %v567 = vpack.c.b16 %v367, %v365
    %v568 = vpack.c.b16 %v370, %v368
    %v569 = vpack.c.b16 %v371, %v369
    %v570 = vpack.c.b16 %v374, %v372
    %v571 = vpack.c.b16 %v375, %v373
    %v572 = vpack.c.b16 %v378, %v376
    %v573 = vpack.c.b16 %v379, %v377
    %v574 = vpack.c.b16 %v382, %v380
    %v575 = vpack.c.b16 %v383, %v381
    %v576 = vpack.c.b16 %v386, %v384
    %v577 = vpack.c.b16 %v387, %v385
    %v578 = vpack.c.b16 %v390, %v388
    %v579 = vpack.c.b16 %v391, %v389
    %v580 = vpack.c.b16 %v394, %v392
    %v581 = vpack.c.b16 %v395, %v393
    %v582 = vpack.c.b16 %v398, %v396
    %v583 = vpack.c.b16 %v399, %v397
    %v584 = vpack.c.b16 %v402, %v400
    %v585 = vpack.c.b16 %v403, %v401
    %v586 = vpack.c.b16 %v406, %v404
    %v587 = vpack.c.b16 %v407, %v405
    %v588 = vpack.c.b16 %v410, %v408
    %v589 = vpack.c.b16 %v411, %v409
    %v590 = vpack.c.b16 %v414, %v412
    %v591 = vpack.c.b16 %v415, %v413
    %v592 = vpack.c.b16 %v418, %v416
    %v593 = vpack.c.b16 %v419, %v417
    %v594 = vpack.c.b16 %v422, %v420
    %v595 = vpack.c.b16 %v423, %v421
    %v596 = vpack.c.b16 %v426, %v424
    %v597 = vpack.c.b16 %v427, %v425
    %v598 = vpack.c.b16 %v430, %v428
    %v599 = vpack.c.b16 %v431, %v429
    %v600 = vpack.c.b16 %v434, %v432
    %v601 = vpack.c.b16 %v435, %v433
    %v602 = vpack.c.b16 %v438, %v436
    %v603 = vpack.c.b16 %v439, %v437
    %v604 = vpack.c.b16 %v442, %v440
    %v605 = vpack.c.b16 %v443, %v441
    %v606 = vpack.c.b16 %v446, %v444
    %v607 = vpack.c.b16 %v447, %v445
    %v608 = vpack.c.b16 %v450, %v448
    %v609 = vpack.c.b16 %v451, %v449
    %v610 = vpack.c.b16 %v454, %v452
    %v611 = vpack.c.b16 %v455, %v453
    %v612 = vpack.c.b16 %v458, %v456
    %v613 = vpack.c.b16 %v459, %v457
    %v614 = vpack.c.b16 %v462, %v460
    %v615 = vpack.c.b16 %v463, %v461
    %v616 = vpack.c.b16 %v466, %v464
    %v617 = vpack.c.b16 %v467, %v465
    %v618 = vpack.c.b16 %v470, %v468
    %v619 = vpack.c.b16 %v471, %v469
    %v620 = vpack.c.b16 %v474, %v472
    %v621 = vpack.c.b16 %v475, %v473
    %v622 = vpack.c.b16 %v478, %v476
    %v623 = vpack.c.b16 %v479, %v477
    %v624 = vpack.c.b16 %v482, %v480
    %v625 = vpack.c.b16 %v483, %v481
    %v626 = vpack.c.b16 %v486, %v484
    %v627 = vpack.c.b16 %v487, %v485
    %v628 = vpack.c.b16 %v490, %v488
    %v629 = vpack.c.b16 %v491, %v489
    %v630 = vpack.c.b16 %v494, %v492
    %v631 = vpack.c.b16 %v495, %v493
    %v632 = vpack.c.b16 %v498, %v496
    %v633 = vpack.c.b16 %v499, %v497
    %v634 = vpack.c.b16 %v502, %v500
    %v635 = vpack.c.b16 %v503, %v501
    %v636 = vpack.c.b16 %v506, %v504
    %v637 = vpack.c.b16 %v507, %v505
    %v638 = vpack.c.b16 %v510, %v508
    %v639 = vpack.c.b16 %v511, %v509
    %v640 = vpack.c.b16 %v514, %v512
    %v641 = vpack.c.b16 %v515, %v513
    %v642 = vpack.c.b16 %v518, %v516
    %v643 = vpack.c.b16 %v519, %v517
    %v644 = vpack.c.b16 %v522, %v520
    %v645 = vpack.c.b16 %v523, %v521
    %v646 = vpack.c.b16 %v526, %v524
    %v647 = vpack.c.b16 %v527, %v525
    %v648 = vpack.c.b16 %v530, %v528
    %v649 = vpack.c.b16 %v531, %v529
    %v650 = vpack.c.b16 %v534, %v532
    %v651 = vpack.c.b16 %v535, %v533
    %v652 = vpack.c.b16 %v538, %v536
    %v653 = vpack.c.b16 %v539, %v537
    %v654 = vpack.c.b16 %v542, %v540
    %v655 = vpack.c.b16 %v543, %v541
    %768 = vmatprep.subr.bf16.mxu0 %v559
    %769 = vmatpush1.bf16.msra.mxu0 %v558
    %770 = vmatprep.subr.bf16.mxu0 %v557
    %771 = vmatpush1.bf16.msra.mxu0 %v556
    %772 = vmatprep.subr.bf16.mxu0 %v555
    %773 = vmatpush1.bf16.msra.mxu0 %v554
    %774 = vmatprep.subr.bf16.mxu0 %v553
    %775 = vmatpush1.bf16.msra.mxu0 %v552
    %776 = vmatprep.subr.bf16.mxu0 %v551
    %777 = vmatpush1.bf16.msra.mxu0 %v550
    %778 = vmatprep.subr.bf16.mxu0 %v549
    %779 = vmatpush1.bf16.msra.mxu0 %v548
    %780 = vmatprep.subr.bf16.mxu0 %v547
    %781 = vmatpush1.bf16.msra.mxu0 %v546
    %782 = vmatprep.subr.bf16.mxu0 %v545
    %783 = vmatpush1.bf16.msra.mxu0 %v544
    %784 = vmatprep.subr.bf16.mxu0 %v575
    %785 = vmatpush2.bf16.msra.mxu0 %v574
    %786 = vmatprep.subr.bf16.mxu0 %v573
    %787 = vmatpush2.bf16.msra.mxu0 %v572
    %788 = vmatprep.subr.bf16.mxu0 %v571
    %789 = vmatpush2.bf16.msra.mxu0 %v570
    %790 = vmatprep.subr.bf16.mxu0 %v569
    %791 = vmatpush2.bf16.msra.mxu0 %v568
    %792 = vmatprep.subr.bf16.mxu0 %v567
    %793 = vmatpush2.bf16.msra.mxu0 %v566
    %794 = vmatprep.subr.bf16.mxu0 %v565
    %795 = vmatpush2.bf16.msra.mxu0 %v564
    %796 = vmatprep.subr.bf16.mxu0 %v563
    %797 = vmatpush2.bf16.msra.mxu0 %v562
    %798 = vmatprep.subr.bf16.mxu0 %v561
    %799 = vmatpush2.bf16.msra.mxu0 %v560
    %800 = vmatprep.mubr.bf16.mxu0 %v195
    %801 = vmatmul.mubr.bf16.gmra.mxu0 %v194
    %v802 = vpop.f32.mrf.mxu0
    %v803 = vadd.f32 %v176, %v802
    %v804 = vpop.f32.mrf.mxu0
    %v805 = vadd.f32 %v180, %v804
    %v806 = vpop.f32.mrf.mxu0
    %v807 = vpop.f32.mrf.mxu0
    %808 = vdwg.mxu0
    %809 = vmatprep.subr.bf16.mxu0 %v591
    %810 = vmatpush1.bf16.msra.mxu0 %v590
    %811 = vmatprep.subr.bf16.mxu0 %v589
    %812 = vmatpush1.bf16.msra.mxu0 %v588
    %813 = vmatprep.subr.bf16.mxu0 %v587
    %814 = vmatpush1.bf16.msra.mxu0 %v586
    %815 = vmatprep.subr.bf16.mxu0 %v585
    %816 = vmatpush1.bf16.msra.mxu0 %v584
    %817 = vmatprep.subr.bf16.mxu0 %v583
    %818 = vmatpush1.bf16.msra.mxu0 %v582
    %819 = vmatprep.subr.bf16.mxu0 %v581
    %820 = vmatpush1.bf16.msra.mxu0 %v580
    %821 = vmatprep.subr.bf16.mxu0 %v579
    %822 = vmatpush1.bf16.msra.mxu0 %v578
    %823 = vmatprep.subr.bf16.mxu0 %v577
    %824 = vmatpush1.bf16.msra.mxu0 %v576
    %825 = vmatprep.subr.bf16.mxu0 %v607
    %826 = vmatpush2.bf16.msra.mxu0 %v606
    %827 = vmatprep.subr.bf16.mxu0 %v605
    %828 = vmatpush2.bf16.msra.mxu0 %v604
    %829 = vmatprep.subr.bf16.mxu0 %v603
    %830 = vmatpush2.bf16.msra.mxu0 %v602
    %831 = vmatprep.subr.bf16.mxu0 %v601
    %832 = vmatpush2.bf16.msra.mxu0 %v600
    %833 = vmatprep.subr.bf16.mxu0 %v599
    %834 = vmatpush2.bf16.msra.mxu0 %v598
    %835 = vmatprep.subr.bf16.mxu0 %v597
    %836 = vmatpush2.bf16.msra.mxu0 %v596
    %837 = vmatprep.subr.bf16.mxu0 %v595
    %838 = vmatpush2.bf16.msra.mxu0 %v594
    %839 = vmatprep.subr.bf16.mxu0 %v593
    %840 = vmatpush2.bf16.msra.mxu0 %v592
    %841 = vmatprep.mubr.bf16.mxu0 %v197
    %842 = vmatmul.mubr.bf16.gmra.mxu0 %v196
    %v843 = vpop.f32.mrf.mxu0
    %v844 = vadd.f32 %v803, %v843
    %v845 = vpop.f32.mrf.mxu0
    %v846 = vadd.f32 %v805, %v845
    %v847 = vpop.f32.mrf.mxu0
    %v848 = vpop.f32.mrf.mxu0
    %849 = vdwg.mxu0
    %850 = vmatprep.subr.bf16.mxu0 %v623
    %851 = vmatpush1.bf16.msra.mxu0 %v622
    %852 = vmatprep.subr.bf16.mxu0 %v621
    %853 = vmatpush1.bf16.msra.mxu0 %v620
    %854 = vmatprep.subr.bf16.mxu0 %v619
    %855 = vmatpush1.bf16.msra.mxu0 %v618
    %856 = vmatprep.subr.bf16.mxu0 %v617
    %857 = vmatpush1.bf16.msra.mxu0 %v616
    %858 = vmatprep.subr.bf16.mxu0 %v615
    %859 = vmatpush1.bf16.msra.mxu0 %v614
    %860 = vmatprep.subr.bf16.mxu0 %v613
    %861 = vmatpush1.bf16.msra.mxu0 %v612
    %862 = vmatprep.subr.bf16.mxu0 %v611
    %863 = vmatpush1.bf16.msra.mxu0 %v610
    %864 = vmatprep.subr.bf16.mxu0 %v609
    %865 = vmatpush1.bf16.msra.mxu0 %v608
    %866 = vmatprep.subr.bf16.mxu0 %v639
    %867 = vmatpush2.bf16.msra.mxu0 %v638
    %868 = vmatprep.subr.bf16.mxu0 %v637
    %869 = vmatpush2.bf16.msra.mxu0 %v636
    %870 = vmatprep.subr.bf16.mxu0 %v635
    %871 = vmatpush2.bf16.msra.mxu0 %v634
    %872 = vmatprep.subr.bf16.mxu0 %v633
    %873 = vmatpush2.bf16.msra.mxu0 %v632
    %874 = vmatprep.subr.bf16.mxu0 %v631
    %875 = vmatpush2.bf16.msra.mxu0 %v630
    %876 = vmatprep.subr.bf16.mxu0 %v629
    %877 = vmatpush2.bf16.msra.mxu0 %v628
    %878 = vmatprep.subr.bf16.mxu0 %v627
    %879 = vmatpush2.bf16.msra.mxu0 %v626
    %880 = vmatprep.subr.bf16.mxu0 %v625
    %881 = vmatpush2.bf16.msra.mxu0 %v624
    %882 = vmatprep.mubr.bf16.mxu0 %v199
    %883 = vmatmul.mubr.bf16.gmra.mxu0 %v198
    %v884 = vpop.f32.mrf.mxu0
    %v885 = vadd.f32 %v844, %v884
    %v886 = vpop.f32.mrf.mxu0
    %v887 = vadd.f32 %v846, %v886
    %v888 = vpop.f32.mrf.mxu0
    %v889 = vpop.f32.mrf.mxu0
    %890 = vdwg.mxu0
    %891 = vmatprep.subr.bf16.mxu0 %v655
    %892 = vmatpush1.bf16.msra.mxu0 %v654
    %893 = vmatprep.subr.bf16.mxu0 %v653
    %894 = vmatpush1.bf16.msra.mxu0 %v652
    %895 = vmatprep.subr.bf16.mxu0 %v651
    %896 = vmatpush1.bf16.msra.mxu0 %v650
    %897 = vmatprep.subr.bf16.mxu0 %v649
    %898 = vmatpush1.bf16.msra.mxu0 %v648
    %899 = vmatprep.subr.bf16.mxu0 %v647
    %900 = vmatpush1.bf16.msra.mxu0 %v646
    %901 = vmatprep.subr.bf16.mxu0 %v645
    %902 = vmatpush1.bf16.msra.mxu0 %v644
    %903 = vmatprep.subr.bf16.mxu0 %v643
    %904 = vmatpush1.bf16.msra.mxu0 %v642
    %905 = vmatprep.subr.bf16.mxu0 %v641
    %906 = vmatpush1.bf16.msra.mxu0 %v640
    %907 = vmatprep.subr.bf16.mxu0 0
    %908 = vmatpush2.bf16.msra.mxu0 0
    %909 = vmatprep.subr.bf16.mxu0 0
    %910 = vmatpush2.bf16.msra.mxu0 0
    %911 = vmatprep.subr.bf16.mxu0 0
    %912 = vmatpush2.bf16.msra.mxu0 0
    %913 = vmatprep.subr.bf16.mxu0 0
    %914 = vmatpush2.bf16.msra.mxu0 0
    %915 = vmatprep.subr.bf16.mxu0 0
    %916 = vmatpush2.bf16.msra.mxu0 0
    %917 = vmatprep.subr.bf16.mxu0 0
    %918 = vmatpush2.bf16.msra.mxu0 0
    %919 = vmatprep.subr.bf16.mxu0 0
    %920 = vmatpush2.bf16.msra.mxu0 0
    %921 = vmatprep.subr.bf16.mxu0 0
    %922 = vmatpush2.bf16.msra.mxu0 0
    %923 = vmatprep.mubr.bf16.mxu0 0
    %924 = vmatmul.mubr.bf16.gmra.mxu0 %v200
    %v925 = vpop.f32.mrf.mxu0
    %v926 = vadd.f32 %v885, %v925
    %v927 = vpop.f32.mrf.mxu0
    %v928 = vadd.f32 %v887, %v927
    %v929 = vpop.f32.mrf.mxu0
    %v930 = vpop.f32.mrf.mxu0
    %931 = vdwg.mxu0
    %v932 = vmax.f32 %v926, 0.0
    %v933 = vmax.f32 %v928, 0.0
    %v934 = vpack.c.bf16 %v932, %v932
    %v935 = vpack.c.bf16 %v933, %v933
    %v936 = vld [vmem:[#allocation4] sm:$0xff]
    %v937 = vld [vmem:[#allocation4 + $0x8] sm:$0xff]
    %v938 = vld [vmem:[#allocation4 + $0x10] sm:$0xff]
    %v939 = vld [vmem:[#allocation4 + $0x18] sm:$0xff]
    %v940 = vld [vmem:[#allocation4 + $0x20] sm:$0xff]
    %v941 = vld [vmem:[#allocation4 + $0x28] sm:$0xff]
    %v942 = vld [vmem:[#allocation4 + $0x30] sm:$0xff]
    %v943 = vld [vmem:[#allocation4 + $0x38] sm:$0xff]
    %v944 = vld [vmem:[#allocation4 + $0x40] sm:$0xff]
    %v945 = vld [vmem:[#allocation4 + $0x48] sm:$0xff]
    %v946 = vld [vmem:[#allocation4 + $0x50] sm:$0xff]
    %v947 = vld [vmem:[#allocation4 + $0x58] sm:$0xff]
    %v948 = vld [vmem:[#allocation4 + $0x60] sm:$0xff]
    %v949 = vld [vmem:[#allocation4 + $0x68] sm:$0xff]
    %v950 = vld [vmem:[#allocation4 + $0x70] sm:$0xff]
    %v951 = vld [vmem:[#allocation4 + $0x78] sm:$0xff]
    %v952 = vld [vmem:[#allocation4 + $0x80] sm:$0xff]
    %v953 = vld [vmem:[#allocation4 + $0x88] sm:$0xff]
    %v954 = vld [vmem:[#allocation4 + $0x90] sm:$0xff]
    %v955 = vld [vmem:[#allocation4 + $0x98] sm:$0xff]
    %v956 = vld [vmem:[#allocation4 + $0xa0] sm:$0xff]
    %v957 = vld [vmem:[#allocation4 + $0xa8] sm:$0xff]
    %v958 = vld [vmem:[#allocation4 + $0xb0] sm:$0xff]
    %v959 = vld [vmem:[#allocation4 + $0xb8] sm:$0xff]
    %v960 = vld [vmem:[#allocation4 + $0xc0] sm:$0xff]
    %v961 = vld [vmem:[#allocation4 + $0xc8] sm:$0xff]
    %v962 = vld [vmem:[#allocation4 + $0xd0] sm:$0xff]
    %v963 = vld [vmem:[#allocation4 + $0xd8] sm:$0xff]
    %v964 = vld [vmem:[#allocation4 + $0xe0] sm:$0xff]
    %v965 = vld [vmem:[#allocation4 + $0xe8] sm:$0xff]
    %v966 = vld [vmem:[#allocation4 + $0xf0] sm:$0xff]
    %v967 = vld [vmem:[#allocation4 + $0xf8] sm:$0xff]
    %v968 = vld [vmem:[%s4] sm:$0x3]
    %v970 = vlaneseq
    %v971 = vshrl.u32 %v970, 7
    %v972 = vsub.s32 0, %v971
    %v973 = vrot.slane %v968, %v972
    %v974 = vlaneseq
    %v975 = vshrl.u32 %v974, 7
    %v976 = vsub.s32 1, %v975
    %v977 = vrot.slane %v968, %v976
    %v1012 = vunpack.c.l.b16 %v936
    %v1013 = vunpack.c.h.b16 %v936
    %v1014 = vunpack.c.l.b16 %v937
    %v1015 = vunpack.c.h.b16 %v937
    %v1016 = vunpack.c.l.b16 %v938
    %v1017 = vunpack.c.h.b16 %v938
    %v1018 = vunpack.c.l.b16 %v939
    %v1019 = vunpack.c.h.b16 %v939
    %v1020 = vunpack.c.l.b16 %v940
    %v1021 = vunpack.c.h.b16 %v940
    %v1022 = vunpack.c.l.b16 %v941
    %v1023 = vunpack.c.h.b16 %v941
    %v1024 = vunpack.c.l.b16 %v942
    %v1025 = vunpack.c.h.b16 %v942
    %v1026 = vunpack.c.l.b16 %v943
    %v1027 = vunpack.c.h.b16 %v943
    %v1028 = vunpack.c.l.b16 %v944
    %v1029 = vunpack.c.h.b16 %v944
    %v1030 = vunpack.c.l.b16 %v945
    %v1031 = vunpack.c.h.b16 %v945
    %v1032 = vunpack.c.l.b16 %v946
    %v1033 = vunpack.c.h.b16 %v946
    %v1034 = vunpack.c.l.b16 %v947
    %v1035 = vunpack.c.h.b16 %v947
    %v1036 = vunpack.c.l.b16 %v948
    %v1037 = vunpack.c.h.b16 %v948
    %v1038 = vunpack.c.l.b16 %v949
    %v1039 = vunpack.c.h.b16 %v949
    %v1040 = vunpack.c.l.b16 %v950
    %v1041 = vunpack.c.h.b16 %v950
    %v1042 = vunpack.c.l.b16 %v951
    %v1043 = vunpack.c.h.b16 %v951
    %v1044 = vunpack.c.l.b16 %v952
    %v1045 = vunpack.c.h.b16 %v952
    %v1046 = vunpack.c.l.b16 %v953
    %v1047 = vunpack.c.h.b16 %v953
    %v1048 = vunpack.c.l.b16 %v954
    %v1049 = vunpack.c.h.b16 %v954
    %v1050 = vunpack.c.l.b16 %v955
    %v1051 = vunpack.c.h.b16 %v955
    %v1052 = vunpack.c.l.b16 %v956
    %v1053 = vunpack.c.h.b16 %v956
    %v1054 = vunpack.c.l.b16 %v957
    %v1055 = vunpack.c.h.b16 %v957
    %v1056 = vunpack.c.l.b16 %v958
    %v1057 = vunpack.c.h.b16 %v958
    %v1058 = vunpack.c.l.b16 %v959
    %v1059 = vunpack.c.h.b16 %v959
    %v1060 = vunpack.c.l.b16 %v960
    %v1061 = vunpack.c.h.b16 %v960
    %v1062 = vunpack.c.l.b16 %v961
    %v1063 = vunpack.c.h.b16 %v961
    %v1064 = vunpack.c.l.b16 %v962
    %v1065 = vunpack.c.h.b16 %v962
    %v1066 = vunpack.c.l.b16 %v963
    %v1067 = vunpack.c.h.b16 %v963
    %v1068 = vunpack.c.l.b16 %v964
    %v1069 = vunpack.c.h.b16 %v964
    %v1070 = vunpack.c.l.b16 %v965
    %v1071 = vunpack.c.h.b16 %v965
    %v1072 = vunpack.c.l.b16 %v966
    %v1073 = vunpack.c.h.b16 %v966
    %v1074 = vunpack.c.l.b16 %v967
    %v1075 = vunpack.c.h.b16 %v967
    %v1076 = vpack.c.b16 %v1014, %v1012
    %v1077 = vpack.c.b16 %v1015, %v1013
    %v1078 = vpack.c.b16 %v1018, %v1016
    %v1079 = vpack.c.b16 %v1019, %v1017
    %v1080 = vpack.c.b16 %v1022, %v1020
    %v1081 = vpack.c.b16 %v1023, %v1021
    %v1082 = vpack.c.b16 %v1026, %v1024
    %v1083 = vpack.c.b16 %v1027, %v1025
    %v1084 = vpack.c.b16 %v1030, %v1028
    %v1085 = vpack.c.b16 %v1031, %v1029
    %v1086 = vpack.c.b16 %v1034, %v1032
    %v1087 = vpack.c.b16 %v1035, %v1033
    %v1088 = vpack.c.b16 %v1038, %v1036
    %v1089 = vpack.c.b16 %v1039, %v1037
    %v1090 = vpack.c.b16 %v1042, %v1040
    %v1091 = vpack.c.b16 %v1043, %v1041
    %v1092 = vpack.c.b16 %v1046, %v1044
    %v1093 = vpack.c.b16 %v1047, %v1045
    %v1094 = vpack.c.b16 %v1050, %v1048
    %v1095 = vpack.c.b16 %v1051, %v1049
    %v1096 = vpack.c.b16 %v1054, %v1052
    %v1097 = vpack.c.b16 %v1055, %v1053
    %v1098 = vpack.c.b16 %v1058, %v1056
    %v1099 = vpack.c.b16 %v1059, %v1057
    %v1100 = vpack.c.b16 %v1062, %v1060
    %v1101 = vpack.c.b16 %v1063, %v1061
    %v1102 = vpack.c.b16 %v1066, %v1064
    %v1103 = vpack.c.b16 %v1067, %v1065
    %v1104 = vpack.c.b16 %v1070, %v1068
    %v1105 = vpack.c.b16 %v1071, %v1069
    %v1106 = vpack.c.b16 %v1074, %v1072
    %v1107 = vpack.c.b16 %v1075, %v1073
    %1140 = vmatprep.subr.bf16.mxu0 %v1091
    %1141 = vmatpush1.bf16.msra.mxu0 %v1090
    %1142 = vmatprep.subr.bf16.mxu0 %v1089
    %1143 = vmatpush1.bf16.msra.mxu0 %v1088
    %1144 = vmatprep.subr.bf16.mxu0 %v1087
    %1145 = vmatpush1.bf16.msra.mxu0 %v1086
    %1146 = vmatprep.subr.bf16.mxu0 %v1085
    %1147 = vmatpush1.bf16.msra.mxu0 %v1084
    %1148 = vmatprep.subr.bf16.mxu0 %v1083
    %1149 = vmatpush1.bf16.msra.mxu0 %v1082
    %1150 = vmatprep.subr.bf16.mxu0 %v1081
    %1151 = vmatpush1.bf16.msra.mxu0 %v1080
    %1152 = vmatprep.subr.bf16.mxu0 %v1079
    %1153 = vmatpush1.bf16.msra.mxu0 %v1078
    %1154 = vmatprep.subr.bf16.mxu0 %v1077
    %1155 = vmatpush1.bf16.msra.mxu0 %v1076
    %1156 = vmatprep.subr.bf16.mxu0 %v1107
    %1157 = vmatpush2.bf16.msra.mxu0 %v1106
    %1158 = vmatprep.subr.bf16.mxu0 %v1105
    %1159 = vmatpush2.bf16.msra.mxu0 %v1104
    %1160 = vmatprep.subr.bf16.mxu0 %v1103
    %1161 = vmatpush2.bf16.msra.mxu0 %v1102
    %1162 = vmatprep.subr.bf16.mxu0 %v1101
    %1163 = vmatpush2.bf16.msra.mxu0 %v1100
    %1164 = vmatprep.subr.bf16.mxu0 %v1099
    %1165 = vmatpush2.bf16.msra.mxu0 %v1098
    %1166 = vmatprep.subr.bf16.mxu0 %v1097
    %1167 = vmatpush2.bf16.msra.mxu0 %v1096
    %1168 = vmatprep.subr.bf16.mxu0 %v1095
    %1169 = vmatpush2.bf16.msra.mxu0 %v1094
    %1170 = vmatprep.subr.bf16.mxu0 %v1093
    %1171 = vmatpush2.bf16.msra.mxu0 %v1092
    %1172 = vmatprep.mubr.bf16.mxu0 %v935
    %1173 = vmatmul.mubr.bf16.gmra.mxu0 %v934
    %v1174 = vpop.f32.mrf.mxu0
    %v1175 = vadd.f32 %v973, %v1174
    %v1176 = vpop.f32.mrf.mxu0
    %v1177 = vadd.f32 %v977, %v1176
    %v1178 = vpop.f32.mrf.mxu0
    %v1179 = vpop.f32.mrf.mxu0
    %1180 = vdwg.mxu0
    %v1181 = vmax.f32 %v1175, 0.0
    %v1182 = vmax.f32 %v1177, 0.0
    %v1183 = vpack.c.bf16 %v1181, %v1181
    %v1184 = vpack.c.bf16 %v1182, %v1182
    %v1185 = vld [vmem:[%s5] sm:$0xf]
    %v1186 = vld [vmem:[%s5 + $0x4] sm:$0xf]
    %v1187 = vld [vmem:[%s5 + $0x8] sm:$0xf]
    %v1188 = vld [vmem:[%s5 + $0xc] sm:$0xf]
    %v1189 = vld [vmem:[%s5 + $0x10] sm:$0xf]
    %v1190 = vld [vmem:[%s5 + $0x14] sm:$0xf]
    %v1191 = vld [vmem:[%s5 + $0x18] sm:$0xf]
    %v1192 = vld [vmem:[%s5 + $0x1c] sm:$0xf]
    %v1193 = vld [vmem:[%s5 + $0x20] sm:$0xf]
    %v1194 = vld [vmem:[%s5 + $0x24] sm:$0xf]
    %v1195 = vld [vmem:[%s5 + $0x28] sm:$0xf]
    %v1196 = vld [vmem:[%s5 + $0x2c] sm:$0xf]
    %v1197 = vld [vmem:[%s5 + $0x30] sm:$0xf]
    %v1198 = vld [vmem:[%s5 + $0x34] sm:$0xf]
    %v1199 = vld [vmem:[%s5 + $0x38] sm:$0xf]
    %v1200 = vld [vmem:[%s5 + $0x3c] sm:$0xf]
    %v1201 = vld [vmem:[%s5 + $0x40] sm:$0xf]
    %v1202 = vld [vmem:[%s5 + $0x44] sm:$0xf]
    %v1203 = vld [vmem:[%s5 + $0x48] sm:$0xf]
    %v1204 = vld [vmem:[%s5 + $0x4c] sm:$0xf]
    %v1205 = vld [vmem:[%s5 + $0x50] sm:$0xf]
    %v1206 = vld [vmem:[%s5 + $0x54] sm:$0xf]
    %v1207 = vld [vmem:[%s5 + $0x58] sm:$0xf]
    %v1208 = vld [vmem:[%s5 + $0x5c] sm:$0xf]
    %v1209 = vld [vmem:[%s5 + $0x60] sm:$0xf]
    %v1210 = vld [vmem:[%s5 + $0x64] sm:$0xf]
    %v1211 = vld [vmem:[%s5 + $0x68] sm:$0xf]
    %v1212 = vld [vmem:[%s5 + $0x6c] sm:$0xf]
    %v1213 = vld [vmem:[%s5 + $0x70] sm:$0xf]
    %v1214 = vld [vmem:[%s5 + $0x74] sm:$0xf]
    %v1215 = vld [vmem:[%s5 + $0x78] sm:$0xf]
    %v1216 = vld [vmem:[%s5 + $0x7c] sm:$0xf]
    %v1217 = vld [vmem:[%s6] sm:$0x1]
    %v1219 = vlaneseq
    %v1220 = vshrl.u32 %v1219, 7
    %v1221 = vsub.s32 0, %v1220
    %v1222 = vrot.slane %v1217, %v1221
    %v1256 = vunpack.c.l.b16 %v1185
    %v1257 = vunpack.c.l.b16 %v1186
    %v1258 = vunpack.c.l.b16 %v1187
    %v1259 = vunpack.c.l.b16 %v1188
    %v1260 = vunpack.c.l.b16 %v1189
    %v1261 = vunpack.c.l.b16 %v1190
    %v1262 = vunpack.c.l.b16 %v1191
    %v1263 = vunpack.c.l.b16 %v1192
    %v1264 = vunpack.c.l.b16 %v1193
    %v1265 = vunpack.c.l.b16 %v1194
    %v1266 = vunpack.c.l.b16 %v1195
    %v1267 = vunpack.c.l.b16 %v1196
    %v1268 = vunpack.c.l.b16 %v1197
    %v1269 = vunpack.c.l.b16 %v1198
    %v1270 = vunpack.c.l.b16 %v1199
    %v1271 = vunpack.c.l.b16 %v1200
    %v1272 = vunpack.c.l.b16 %v1201
    %v1273 = vunpack.c.l.b16 %v1202
    %v1274 = vunpack.c.l.b16 %v1203
    %v1275 = vunpack.c.l.b16 %v1204
    %v1276 = vunpack.c.l.b16 %v1205
    %v1277 = vunpack.c.l.b16 %v1206
    %v1278 = vunpack.c.l.b16 %v1207
    %v1279 = vunpack.c.l.b16 %v1208
    %v1280 = vunpack.c.l.b16 %v1209
    %v1281 = vunpack.c.l.b16 %v1210
    %v1282 = vunpack.c.l.b16 %v1211
    %v1283 = vunpack.c.l.b16 %v1212
    %v1284 = vunpack.c.l.b16 %v1213
    %v1285 = vunpack.c.l.b16 %v1214
    %v1286 = vunpack.c.l.b16 %v1215
    %v1287 = vunpack.c.l.b16 %v1216
    %v1288 = vpack.c.b16 %v1257, %v1256
    %v1289 = vpack.c.b16 %v1259, %v1258
    %v1290 = vpack.c.b16 %v1261, %v1260
    %v1291 = vpack.c.b16 %v1263, %v1262
    %v1292 = vpack.c.b16 %v1265, %v1264
    %v1293 = vpack.c.b16 %v1267, %v1266
    %v1294 = vpack.c.b16 %v1269, %v1268
    %v1295 = vpack.c.b16 %v1271, %v1270
    %v1296 = vpack.c.b16 %v1273, %v1272
    %v1297 = vpack.c.b16 %v1275, %v1274
    %v1298 = vpack.c.b16 %v1277, %v1276
    %v1299 = vpack.c.b16 %v1279, %v1278
    %v1300 = vpack.c.b16 %v1281, %v1280
    %v1301 = vpack.c.b16 %v1283, %v1282
    %v1302 = vpack.c.b16 %v1285, %v1284
    %v1303 = vpack.c.b16 %v1287, %v1286
    %1320 = vmatprep.subr.bf16.mxu0 0
    %1321 = vmatpush1.bf16.msra.mxu0 %v1295
    %1322 = vmatprep.subr.bf16.mxu0 0
    %1323 = vmatpush1.bf16.msra.mxu0 %v1294
    %1324 = vmatprep.subr.bf16.mxu0 0
    %1325 = vmatpush1.bf16.msra.mxu0 %v1293
    %1326 = vmatprep.subr.bf16.mxu0 0
    %1327 = vmatpush1.bf16.msra.mxu0 %v1292
    %1328 = vmatprep.subr.bf16.mxu0 0
    %1329 = vmatpush1.bf16.msra.mxu0 %v1291
    %1330 = vmatprep.subr.bf16.mxu0 0
    %1331 = vmatpush1.bf16.msra.mxu0 %v1290
    %1332 = vmatprep.subr.bf16.mxu0 0
    %1333 = vmatpush1.bf16.msra.mxu0 %v1289
    %1334 = vmatprep.subr.bf16.mxu0 0
    %1335 = vmatpush1.bf16.msra.mxu0 %v1288
    %1336 = vmatprep.subr.bf16.mxu0 0
    %1337 = vmatpush2.bf16.msra.mxu0 %v1303
    %1338 = vmatprep.subr.bf16.mxu0 0
    %1339 = vmatpush2.bf16.msra.mxu0 %v1302
    %1340 = vmatprep.subr.bf16.mxu0 0
    %1341 = vmatpush2.bf16.msra.mxu0 %v1301
    %1342 = vmatprep.subr.bf16.mxu0 0
    %1343 = vmatpush2.bf16.msra.mxu0 %v1300
    %1344 = vmatprep.subr.bf16.mxu0 0
    %1345 = vmatpush2.bf16.msra.mxu0 %v1299
    %1346 = vmatprep.subr.bf16.mxu0 0
    %1347 = vmatpush2.bf16.msra.mxu0 %v1298
    %1348 = vmatprep.subr.bf16.mxu0 0
    %1349 = vmatpush2.bf16.msra.mxu0 %v1297
    %1350 = vmatprep.subr.bf16.mxu0 0
    %1351 = vmatpush2.bf16.msra.mxu0 %v1296
    %1352 = vmatprep.mubr.bf16.mxu0 %v1184
    %1353 = vmatmul.mubr.bf16.gmra.mxu0 %v1183
    %v1354 = vpop.f32.mrf.mxu0
    %v1355 = vadd.f32 %v1222, %v1354
    %v1356 = vpop.f32.mrf.mxu0
    %v1357 = vpop.f32.mrf.mxu0
    %v1358 = vpop.f32.mrf.mxu0
    %1359 = vdwg.mxu0
    %1360 = vst [vmem:[%s7] sm:$0xff] %v1355
    // Predicated region
    $region38: #{mlp_forward.1} parent=1 // pred_check
      _
    $region39: #{mlp_forward.1} parent=1 // pred_check_branch
      %1362 = sbr.rel (0) target = $region41
    $region40: #{mlp_forward.1} parent=1 // pred_region
      _
    $region41: #{mlp_forward.1} parent=1 // pred_fallthru
      _
    // Predicated region
    $region42: #{mlp_forward.1} parent=1 // pred_check
      _
    $region43: #{mlp_forward.1} parent=1 // pred_check_branch
      %1364 = sbr.rel (0) target = $region45
    $region44: #{mlp_forward.1} parent=1 // pred_region
      _
    $region45: #{mlp_forward.1} parent=1 // pred_fallthru
      _
    %1365 = vsyncpa [#allocation3], 1
    %1366 = vsyncpa [#allocation5], 1

</llo_original>
